<compile_context>
chip_gen: v6e
topology: v6e:2x2x1
jax: 0.10.0
libtpu: 0.0.40
codegen_flags: <defaults>
</compile_context>

<pallas_src>
import functools

import jax
import jax.numpy as jnp
from jax.experimental import pallas as pl
from jax.experimental.pallas import tpu as pltpu

_LANES = 128
_TILE_ROWS = 2048          # 2048 x 128 x 4B = 1 MiB per f32 block


def _msd_kernel(x_ref, o_ref, *, num_samples, thresh, scale, seed):
    """One (tile_rows, 128) block: out = x * keep_count * 1/((1-p)*num_samples)."""
    tr, tl = x_ref.shape
    pid = pl.program_id(0)

    # Global element index (row-major over the padded slab) -> per-tile and
    # per-core mask independence comes for free.
    row = jax.lax.broadcasted_iota(jnp.int32, (tr, tl), 0)
    col = jax.lax.broadcasted_iota(jnp.int32, (tr, tl), 1)
    gidx = ((pid * tr + row) * tl + col).astype(jnp.uint32)

    thresh_u = jnp.uint32(thresh)
    cnt = jnp.zeros((tr, tl), jnp.float32)

    # Two independent masks per 32-bit hash (16-bit fields).
    n_groups = (num_samples + 1) // 2
    for g in range(n_groups):
        salt = (int(seed) * 0x9E3779B1 + (g + 1) * 0x85EBCA6B) & 0xFFFFFFFF
        h = gidx ^ jnp.uint32(salt)
        # murmur3 fmix32 -- good avalanche even for sequential counters.
        h = h ^ (h >> 16)
        h = h * jnp.uint32(0x85EBCA6B)
        h = h ^ (h >> 13)
        h = h * jnp.uint32(0xC2B2AE35)
        h = h ^ (h >> 16)
        for s in range(min(2, num_samples - 2 * g)):
            field = (h >> jnp.uint32(16 * s)) & jnp.uint32(0xFFFF)
            cnt = cnt + (field < thresh_u).astype(jnp.float32)

    x = x_ref[...].astype(jnp.float32)
    o_ref[...] = (x * (cnt * jnp.float32(scale))).astype(o_ref.dtype)


def multi_sample_dropout(x, dropout_rate, num_samples, seed=0, training=True):
    """Pallas TPU implementation of MultiSampleDropout.forward."""
    if (not training) or dropout_rate == 0.0:
        # F.dropout is the identity in eval mode / p == 0.
        return x
    if dropout_rate >= 1.0:
        # p == 1 drops everything -> mean of zeros.
        return jnp.zeros_like(x)

    num_samples = int(num_samples)
    keep = 1.0 - float(dropout_rate)
    thresh = int(round(keep * 65536.0))          # integer keep threshold
    scale = 1.0 / (keep * num_samples)           # inverted-dropout scale / mean

    orig_shape = x.shape
    n = x.size
    rows = pl.cdiv(n, _LANES)
    pad = rows * _LANES - n

    xf = x.reshape(-1)
    if pad:
        # TODO(synk): handle the ragged tail in-kernel (masked last tile)
        # instead of a wrapper-side pad+slice round trip through HBM.
        xf = jnp.pad(xf, (0, pad))
    x2 = xf.reshape(rows, _LANES)

    tile_rows = min(rows, _TILE_ROWS)            # full-array block if small
    grid = pl.cdiv(rows, tile_rows)

    kernel = functools.partial(
        _msd_kernel,
        num_samples=num_samples,
        thresh=thresh,
        scale=scale,
        seed=int(seed),
    )

    out2 = pl.pallas_call(
        kernel,
        out_shape=jax.ShapeDtypeStruct((rows, _LANES), x.dtype),
        grid=(grid,),
        in_specs=[pl.BlockSpec((tile_rows, _LANES), lambda i: (i, 0))],
        out_specs=pl.BlockSpec((tile_rows, _LANES), lambda i: (i, 0)),
        compiler_params=pltpu.CompilerParams(
            dimension_semantics=("parallel",),
        ),
    )(x2)

    if pad:
        return out2.reshape(-1)[:n].reshape(orig_shape)
    return out2.reshape(orig_shape)


if __name__ == "__main__":
    key = jax.random.PRNGKey(0)
    # Small NCHW input consistent with the module's usage.
    x = jax.random.normal(key, (2, 4, 16, 16), dtype=jnp.float32)

    dropout_rate = 0.3
    num_samples = 4
    keep = 1.0 - dropout_rate

    y = multi_sample_dropout(x, dropout_rate, num_samples, seed=42, training=True)
    y = jax.block_until_ready(y)

    assert y.shape == x.shape and y.dtype == x.dtype
    assert bool(jnp.all(jnp.isfinite(y)))

    # Every output element must be x * k / (keep * num_samples) for an
    # integer keep-count k in [0, num_samples].
    k = (y / x) * (keep * num_samples)
    kr = jnp.round(k)
    assert bool(jnp.all(jnp.abs(k - kr) < 1e-3))
    assert bool(jnp.all((kr >= 0) & (kr <= num_samples)))
    # Empirical keep rate should be close to 1 - p (8192 Bernoulli draws).
    emp_keep = float(jnp.mean(kr) / num_samples)
    assert abs(emp_keep - keep) < 0.05

    # eval-mode path (identity) sanity check
    y_eval = multi_sample_dropout(x, dropout_rate, num_samples, training=False)
    assert bool(jnp.all(y_eval == x))

    # p == 1.0 edge case -> all-zero output (no inf/NaN)
    y_p1 = multi_sample_dropout(x, 1.0, num_samples, seed=7, training=True)
    assert bool(jnp.all(y_p1 == 0))

    print("KERNEL_OK")
</pallas_src>

<mosaic_0001>
module attributes {stable_mosaic.version = 11 : i64} {
  func.func @_msd_kernel(%arg0: i32, %arg1: memref<16x128xf32, #tpu.memory_space<vmem>>, %arg2: memref<16x128xf32, #tpu.memory_space<vmem>>) attributes {dimension_semantics = [#tpu.dimension_semantics<parallel>], iteration_bounds = array<i64: 1>, scalar_prefetch = 0 : i64, scratch_operands = 0 : i64, tpu.core_type = #tpu.core_type<tc>, window_params = [{transform_indices = @transform_0, window_bounds = array<i64: 16, 128>}, {transform_indices = @transform_1, window_bounds = array<i64: 16, 128>}]} {
    %0 = tpu.iota {dimensions = array<i32: 0>} : vector<16x128xi32>
    %1 = tpu.iota {dimensions = array<i32: 1>} : vector<16x128xi32>
    %c16_i32 = arith.constant 16 : i32
    %2 = arith.muli %arg0, %c16_i32 : i32
    %3 = vector.broadcast %2 : i32 to vector<16x128xi32>
    %4 = arith.addi %3, %0 : vector<16x128xi32>
    %c128_i32 = arith.constant 128 : i32
    %5 = vector.broadcast %c128_i32 : i32 to vector<16x128xi32>
    %6 = arith.muli %4, %5 : vector<16x128xi32>
    %7 = arith.addi %6, %1 : vector<16x128xi32>
    %cst = arith.constant 0.000000e+00 : f32
    %8 = vector.broadcast %cst : f32 to vector<16x128xf32>
    %c2063974773_i32 = arith.constant 2063974773 : i32
    %9 = vector.broadcast %c2063974773_i32 : i32 to vector<16x128xi32>
    %10 = arith.xori %7, %9 : vector<16x128xi32>
    %c16_i32_0 = arith.constant 16 : i32
    %11 = vector.broadcast %c16_i32_0 : i32 to vector<16x128xi32>
    %12 = arith.shrui %10, %11 : vector<16x128xi32>
    %13 = arith.xori %10, %12 : vector<16x128xi32>
    %c-2048144789_i32 = arith.constant -2048144789 : i32
    %14 = vector.broadcast %c-2048144789_i32 : i32 to vector<16x128xi32>
    %15 = arith.muli %13, %14 : vector<16x128xi32>
    %c13_i32 = arith.constant 13 : i32
    %16 = vector.broadcast %c13_i32 : i32 to vector<16x128xi32>
    %17 = arith.shrui %15, %16 : vector<16x128xi32>
    %18 = arith.xori %15, %17 : vector<16x128xi32>
    %c-1028477387_i32 = arith.constant -1028477387 : i32
    %19 = vector.broadcast %c-1028477387_i32 : i32 to vector<16x128xi32>
    %20 = arith.muli %18, %19 : vector<16x128xi32>
    %c16_i32_1 = arith.constant 16 : i32
    %21 = vector.broadcast %c16_i32_1 : i32 to vector<16x128xi32>
    %22 = arith.shrui %20, %21 : vector<16x128xi32>
    %23 = arith.xori %20, %22 : vector<16x128xi32>
    %c0_i32 = arith.constant 0 : i32
    %24 = vector.broadcast %c0_i32 : i32 to vector<16x128xi32>
    %25 = arith.shrui %23, %24 : vector<16x128xi32>
    %c65535_i32 = arith.constant 65535 : i32
    %26 = vector.broadcast %c65535_i32 : i32 to vector<16x128xi32>
    %27 = arith.andi %25, %26 : vector<16x128xi32>
    %c45875_i32 = arith.constant 45875 : i32
    %28 = vector.broadcast %c45875_i32 : i32 to vector<16x128xi32>
    %29 = arith.cmpi ult, %27, %28 : vector<16x128xi32>
    %30 = arith.extui %29 : vector<16x128xi1> to vector<16x128xi32>
    %31 = arith.sitofp %30 : vector<16x128xi32> to vector<16x128xf32>
    %32 = arith.addf %8, %31 : vector<16x128xf32>
    %c16_i32_2 = arith.constant 16 : i32
    %33 = vector.broadcast %c16_i32_2 : i32 to vector<16x128xi32>
    %34 = arith.shrui %23, %33 : vector<16x128xi32>
    %c65535_i32_3 = arith.constant 65535 : i32
    %35 = vector.broadcast %c65535_i32_3 : i32 to vector<16x128xi32>
    %36 = arith.andi %34, %35 : vector<16x128xi32>
    %c45875_i32_4 = arith.constant 45875 : i32
    %37 = vector.broadcast %c45875_i32_4 : i32 to vector<16x128xi32>
    %38 = arith.cmpi ult, %36, %37 : vector<16x128xi32>
    %39 = arith.extui %38 : vector<16x128xi1> to vector<16x128xi32>
    %40 = arith.sitofp %39 : vector<16x128xi32> to vector<16x128xf32>
    %41 = arith.addf %32, %40 : vector<16x128xf32>
    %c15829984_i32 = arith.constant 15829984 : i32
    %42 = vector.broadcast %c15829984_i32 : i32 to vector<16x128xi32>
    %43 = arith.xori %7, %42 : vector<16x128xi32>
    %c16_i32_5 = arith.constant 16 : i32
    %44 = vector.broadcast %c16_i32_5 : i32 to vector<16x128xi32>
    %45 = arith.shrui %43, %44 : vector<16x128xi32>
    %46 = arith.xori %43, %45 : vector<16x128xi32>
    %c-2048144789_i32_6 = arith.constant -2048144789 : i32
    %47 = vector.broadcast %c-2048144789_i32_6 : i32 to vector<16x128xi32>
    %48 = arith.muli %46, %47 : vector<16x128xi32>
    %c13_i32_7 = arith.constant 13 : i32
    %49 = vector.broadcast %c13_i32_7 : i32 to vector<16x128xi32>
    %50 = arith.shrui %48, %49 : vector<16x128xi32>
    %51 = arith.xori %48, %50 : vector<16x128xi32>
    %c-1028477387_i32_8 = arith.constant -1028477387 : i32
    %52 = vector.broadcast %c-1028477387_i32_8 : i32 to vector<16x128xi32>
    %53 = arith.muli %51, %52 : vector<16x128xi32>
    %c16_i32_9 = arith.constant 16 : i32
    %54 = vector.broadcast %c16_i32_9 : i32 to vector<16x128xi32>
    %55 = arith.shrui %53, %54 : vector<16x128xi32>
    %56 = arith.xori %53, %55 : vector<16x128xi32>
    %c0_i32_10 = arith.constant 0 : i32
    %57 = vector.broadcast %c0_i32_10 : i32 to vector<16x128xi32>
    %58 = arith.shrui %56, %57 : vector<16x128xi32>
    %c65535_i32_11 = arith.constant 65535 : i32
    %59 = vector.broadcast %c65535_i32_11 : i32 to vector<16x128xi32>
    %60 = arith.andi %58, %59 : vector<16x128xi32>
    %c45875_i32_12 = arith.constant 45875 : i32
    %61 = vector.broadcast %c45875_i32_12 : i32 to vector<16x128xi32>
    %62 = arith.cmpi ult, %60, %61 : vector<16x128xi32>
    %63 = arith.extui %62 : vector<16x128xi1> to vector<16x128xi32>
    %64 = arith.sitofp %63 : vector<16x128xi32> to vector<16x128xf32>
    %65 = arith.addf %41, %64 : vector<16x128xf32>
    %c16_i32_13 = arith.constant 16 : i32
    %66 = vector.broadcast %c16_i32_13 : i32 to vector<16x128xi32>
    %67 = arith.shrui %56, %66 : vector<16x128xi32>
    %c65535_i32_14 = arith.constant 65535 : i32
    %68 = vector.broadcast %c65535_i32_14 : i32 to vector<16x128xi32>
    %69 = arith.andi %67, %68 : vector<16x128xi32>
    %c45875_i32_15 = arith.constant 45875 : i32
    %70 = vector.broadcast %c45875_i32_15 : i32 to vector<16x128xi32>
    %71 = arith.cmpi ult, %69, %70 : vector<16x128xi32>
    %72 = arith.extui %71 : vector<16x128xi1> to vector<16x128xi32>
    %73 = arith.sitofp %72 : vector<16x128xi32> to vector<16x128xf32>
    %74 = arith.addf %65, %73 : vector<16x128xf32>
    %c0 = arith.constant 0 : index
    %c0_16 = arith.constant 0 : index
    %75 = vector.load %arg1[%c0, %c0_16] : memref<16x128xf32, #tpu.memory_space<vmem>>, vector<16x128xf32>
    %cst_17 = arith.constant 0.357142866 : f32
    %76 = vector.broadcast %cst_17 : f32 to vector<16x128xf32>
    %77 = arith.mulf %74, %76 : vector<16x128xf32>
    %78 = arith.mulf %75, %77 : vector<16x128xf32>
    %c0_18 = arith.constant 0 : index
    %c0_19 = arith.constant 0 : index
    %79 = vector.load %arg2[%c0_18, %c0_19] : memref<16x128xf32, #tpu.memory_space<vmem>>, vector<16x128xf32>
    tpu.vector_store %arg2[%c0_18, %c0_19], %78 {strides = array<i32>} : memref<16x128xf32, #tpu.memory_space<vmem>>, vector<16x128xf32>,
    return
  }
  func.func @transform_0(%arg0: i32) -> (i32, i32) {
    %c0_i32 = arith.constant 0 : i32
    %c0_i32_0 = arith.constant 0 : i32
    return %arg0, %c0_i32 : i32, i32
  }
  func.func @transform_1(%arg0: i32) -> (i32, i32) {
    %c0_i32 = arith.constant 0 : i32
    %c0_i32_0 = arith.constant 0 : i32
    return %arg0, %c0_i32 : i32, i32
  }
}

</mosaic_0001>

<llo_original>
// kernel: tpu_custom_call.1
$region0: #{tpu_custom_call.1}
  #allocation0 [shape = 'u32[]', space=smem, size = 0x4, offset = 0x4, fixed_abs, tag = 'smem constant byte address 0x4 - core index']
  #allocation1 [shape = 'u32[144,128]{1,0:T(1,128)}', space=vmem, size = 0x12000, scoped, tag = 'internal scratch']
  %s0 = inlined_call_operand.hbm [shape: f32[16,128], index: 0, kind: input, shape index: {}]
  %s1 = inlined_call_operand.hbm [shape: f32[16,128], index: 1, kind: output, shape index: {}]
  %s2 = sld [smem:[#allocation0]]
  $region18: #{tpu_custom_call.1} parent=0
    _
  %s4 = ssub.s32 1, %s2
  %s5 = scalar_select 0, %s4, %s2
  $region1: #{tpu_custom_call.1} parent=0
    #allocation2 [shape = 'u8[8192]{0}', space=vmem, size = 0x2000, scoped, tag = 'input window, operand 0, single buffered']
    #allocation3 [shape = 's32[1]{0}', space=sflag, size = 0x4, scoped, tag = 'scoped memory for tpu_custom_call.1']
    #allocation4 [shape = 's32[1]{0}', space=sflag, size = 0x4, scoped, tag = 'scoped memory for tpu_custom_call.1']
    #allocation5 [shape = 'u8[8192]{0}', space=vmem, size = 0x2000, scoped, tag = 'output window, operand 0, single buffered']
    %6 = vsyncpa [#allocation3], 0
    %7 = vsyncpa [#allocation4], 0
    // Predicated region
    $region2: #{tpu_custom_call.1} parent=1 // pred_check
      _
    $region3: #{tpu_custom_call.1} parent=1 // pred_check_branch
      %9 = sbr.rel (0) target = $region5
    $region4: #{tpu_custom_call.1} parent=1 // pred_region
      %s11 = ssub.s32 256, 256
      %12 = vsyncadd [#allocation3], %s11
      %s13 = sshll.u32 [#allocation2], 4
      %s14 = int_to_ptr.vmem [resolvable:$true] %s13
      %19 = dma.hbm_to_vmem [thread:$0]  %s0, 256, %s14, [#allocation3], 128, 128, 8
    $region5: #{tpu_custom_call.1} parent=1 // pred_fallthru
      _
    // Predicated region
    $region6: #{tpu_custom_call.1} parent=1 // pred_check
      _
    $region7: #{tpu_custom_call.1} parent=1 // pred_check_branch
      %21 = sbr.rel (0) target = $region9
    $region8: #{tpu_custom_call.1} parent=1 // pred_region
      %22 = dma.done [#allocation3], 256
    $region9: #{tpu_custom_call.1} parent=1 // pred_fallthru
      _
    %v23 = vlaneseq
    %v24 = vshrl.u32 %v23, 7
    %v25 = vadd.s32 %v24, 8
    %v26 = vlaneseq
    %v27 = vand.u32 %v26, 127
    %s28 = smul.u32 0, 16
    %v29 = vstv %s28
    %v30 = vadd.s32 %v29, %v24
    %v31 = vadd.s32 %v29, %v25
    %v32 = vmul.u32 %v30, 128
    %v33 = vmul.u32 %v31, 128
    %v34 = vadd.s32 %v32, %v27
    %v35 = vadd.s32 %v33, %v27
    %v36 = vxor.u32 %v34, 2063974773
    %v37 = vxor.u32 %v35, 2063974773
    %v38 = vshrl.u32 %v36, 16
    %v39 = vshrl.u32 %v37, 16
    %v40 = vxor.u32 %v36, %v38
    %v41 = vxor.u32 %v37, %v39
    %v42 = vmul.u32 %v40, 2246822507
    %v43 = vmul.u32 %v41, 2246822507
    %v44 = vshrl.u32 %v42, 13
    %v45 = vshrl.u32 %v43, 13
    %v46 = vxor.u32 %v42, %v44
    %v47 = vxor.u32 %v43, %v45
    %v48 = vmul.u32 %v46, 3266489909
    %v49 = vmul.u32 %v47, 3266489909
    %v50 = vshrl.u32 %v48, 16
    %v51 = vshrl.u32 %v49, 16
    %v52 = vxor.u32 %v48, %v50
    %v53 = vxor.u32 %v49, %v51
    %v54 = vand.u32 %v52, 65535
    %v55 = vand.u32 %v53, 65535
    %vm56 = vcmp.lt.u32.totalorder %v54, 45875
    %vm57 = vcmp.lt.u32.totalorder %v55, 45875
    %v58 = vsel %vm56, 1, 0
    %v59 = vsel %vm57, 1, 0
    %v60 = vcvt.s32.f32 %v58
    %v61 = vcvt.s32.f32 %v59
    %v62 = vadd.f32 %v60, 0.0
    %v63 = vadd.f32 %v61, 0.0
    %v64 = vshrl.u32 %v52, 16
    %v65 = vshrl.u32 %v53, 16
    %v66 = vand.u32 %v64, 65535
    %v67 = vand.u32 %v65, 65535
    %vm68 = vcmp.lt.u32.totalorder %v66, 45875
    %vm69 = vcmp.lt.u32.totalorder %v67, 45875
    %v70 = vsel %vm68, 1, 0
    %v71 = vsel %vm69, 1, 0
    %v72 = vcvt.s32.f32 %v70
    %v73 = vcvt.s32.f32 %v71
    %v74 = vadd.f32 %v62, %v72
    %v75 = vadd.f32 %v63, %v73
    %v76 = vxor.u32 %v34, 15829984
    %v77 = vxor.u32 %v35, 15829984
    %v78 = vshrl.u32 %v76, 16
    %v79 = vshrl.u32 %v77, 16
    %v80 = vxor.u32 %v76, %v78
    %v81 = vxor.u32 %v77, %v79
    %v82 = vmul.u32 %v80, 2246822507
    %v83 = vmul.u32 %v81, 2246822507
    %v84 = vshrl.u32 %v82, 13
    %v85 = vshrl.u32 %v83, 13
    %v86 = vxor.u32 %v82, %v84
    %v87 = vxor.u32 %v83, %v85
    %v88 = vmul.u32 %v86, 3266489909
    %v89 = vmul.u32 %v87, 3266489909
    %v90 = vshrl.u32 %v88, 16
    %v91 = vshrl.u32 %v89, 16
    %v92 = vxor.u32 %v88, %v90
    %v93 = vxor.u32 %v89, %v91
    %v94 = vand.u32 %v92, 65535
    %v95 = vand.u32 %v93, 65535
    %vm96 = vcmp.lt.u32.totalorder %v94, 45875
    %vm97 = vcmp.lt.u32.totalorder %v95, 45875
    %v98 = vsel %vm96, 1, 0
    %v99 = vsel %vm97, 1, 0
    %v100 = vcvt.s32.f32 %v98
    %v101 = vcvt.s32.f32 %v99
    %v102 = vadd.f32 %v74, %v100
    %v103 = vadd.f32 %v75, %v101
    %v104 = vshrl.u32 %v92, 16
    %v105 = vshrl.u32 %v93, 16
    %v106 = vand.u32 %v104, 65535
    %v107 = vand.u32 %v105, 65535
    %vm108 = vcmp.lt.u32.totalorder %v106, 45875
    %vm109 = vcmp.lt.u32.totalorder %v107, 45875
    %v110 = vsel %vm108, 1, 0
    %v111 = vsel %vm109, 1, 0
    %v112 = vcvt.s32.f32 %v110
    %v113 = vcvt.s32.f32 %v111
    %v114 = vadd.f32 %v102, %v112
    %v115 = vadd.f32 %v103, %v113
    %v116 = vld [vmem:[#allocation2] sm:$0xff]
    %v117 = vld [vmem:[#allocation2 + $0x8] sm:$0xff]
    %v118 = vmul.f32 %v114, 0.35714287
    %v119 = vmul.f32 %v115, 0.35714287
    %v120 = vmul.f32 %v116, %v118
    %v121 = vmul.f32 %v117, %v119
    %122 = vst [vmem:[#allocation5] sm:$0xff] %v120
    %123 = vst [vmem:[#allocation5 + $0x8] sm:$0xff] %v121
    // Predicated region
    $region10: #{tpu_custom_call.1} parent=1 // pred_check
      _
    $region11: #{tpu_custom_call.1} parent=1 // pred_check_branch
      %125 = sbr.rel (0) target = $region13
    $region12: #{tpu_custom_call.1} parent=1 // pred_region
      %s127 = ssub.s32 256, 256
      %128 = vsyncadd [#allocation4], %s127
      %s129 = sshll.u32 [#allocation5], 4
      %s130 = int_to_ptr.vmem [resolvable:$true] %s129
      %135 = dma.vmem_to_hbm [thread:$0]  %s130, 256, %s1, [#allocation4], 128, 128, 8
    $region13: #{tpu_custom_call.1} parent=1 // pred_fallthru
      _
    // Predicated region
    $region14: #{tpu_custom_call.1} parent=1 // pred_check
      _
    $region15: #{tpu_custom_call.1} parent=1 // pred_check_branch
      %137 = sbr.rel (0) target = $region17
    $region16: #{tpu_custom_call.1} parent=1 // pred_region
      %138 = dma.done [#allocation4], 256
    $region17: #{tpu_custom_call.1} parent=1 // pred_fallthru
      _
    %139 = vsyncpa [#allocation3], 1
    %140 = vsyncpa [#allocation4], 1

</llo_original>
